<compile_context>
chip_gen: v6e
topology: v6e:2x2x1
jax: 0.10.0
libtpu: 0.0.40
codegen_flags: <defaults>
</compile_context>

<pallas_src>
import math

import jax
import jax.numpy as jnp
from jax.experimental import pallas as pl
from jax.experimental.pallas import tpu as pltpu

GAMMA = 0.99
_HALF_LOG_2PI = 0.5 * math.log(2.0 * math.pi)


def _qloss_kernel(alpha_ref, act_pack_ref, q_pack_ref, out_ref):
    alpha = alpha_ref[0, 0]

    A = act_pack_ref.shape[1]          # action dim (sublane axis)
    B = q_pack_ref.shape[1]            # batch (lane axis)

    mean = act_pack_ref[0]             # [A, B]  float32
    std = act_pack_ref[1]              # [A, B]
    act = act_pack_ref[2]              # [A, B]

    # Diagonal Gaussian log-prob, summed over the action (sublane) axis.
    # exact reciprocal (approx=False) keeps the 1e-5 tolerance intact.
    inv_std = pl.reciprocal(std)
    z = (act - mean) * inv_std
    logp_core = jnp.sum(-0.5 * z * z - jnp.log(std), axis=0, keepdims=True)  # [1,B]
    # constant term hoisted out of the element-wise expression
    log_prob = logp_core - (A * _HALF_LOG_2PI)                               # [1,B]

    qp = q_pack_ref[...]               # [6, B]  float32
    q1 = qp[0:1, :]
    q2 = qp[1:2, :]
    tq1 = qp[2:3, :]
    tq2 = qp[3:4, :]
    reward = qp[4:5, :]
    done = qp[5:6, :]

    target_value = jnp.minimum(tq1, tq2) - alpha * log_prob
    # .detach() is a no-op for a pure forward evaluation
    target_q = reward + (1.0 - done) * GAMMA * target_value

    d1 = target_q - q1
    d2 = target_q - q2
    # fused MSE reductions: one cross-lane reduce + a single scalar scale
    loss = jnp.sum(d1 * d1 + d2 * d2) * (0.5 / B)

    out_ref[0, 0] = loss


def q_loss(predicted_q1, predicted_q2, target_next_q1, target_next_q2,
           next_mean, next_std, next_actions, reward, done, alpha):
    B = predicted_q1.shape[0]
    A = next_mean.shape[-1]

    # Pack the six [B,1] tensors into one lane-dense [6, B] array (one DMA).
    q_pack = jnp.concatenate(
        [predicted_q1, predicted_q2, target_next_q1, target_next_q2,
         reward, done], axis=-1).astype(jnp.float32).T            # [6, B]

    # Pack the Gaussian inputs into one [3, A, B] array (batch on lanes).
    act_pack = jnp.stack(
        [next_mean.T, next_std.T, next_actions.T], axis=0
    ).astype(jnp.float32)                                          # [3, A, B]

    alpha2d = jnp.asarray(alpha, jnp.float32).reshape(1, 1)

    smem = pl.BlockSpec(memory_space=pltpu.MemorySpace.SMEM)
    vmem = pl.BlockSpec(memory_space=pltpu.MemorySpace.VMEM)

    cost = pl.CostEstimate(
        flops=10 * B * A + 14 * B,
        transcendentals=2 * B * A,                  # log(std) + reciprocal
        bytes_accessed=4 * (q_pack.size + act_pack.size + 2),
    )

    out = pl.pallas_call(
        _qloss_kernel,
        out_shape=jax.ShapeDtypeStruct((1, 1), jnp.float32),
        in_specs=[smem, vmem, vmem],
        out_specs=smem,
        cost_estimate=cost,
    )(alpha2d, act_pack, q_pack)
    return out[0, 0]


def _q_loss_ref(predicted_q1, predicted_q2, target_next_q1, target_next_q2,
                next_mean, next_std, next_actions, reward, done, alpha):
    logp = jnp.sum(
        -0.5 * ((next_actions - next_mean) / next_std) ** 2
        - jnp.log(next_std) - _HALF_LOG_2PI, axis=-1, keepdims=True)
    target_value = jnp.minimum(target_next_q1, target_next_q2) - alpha * logp
    target_q = reward + (1.0 - done) * GAMMA * target_value
    l1 = jnp.mean(0.5 * (target_q - predicted_q1) ** 2)
    l2 = jnp.mean(0.5 * (target_q - predicted_q2) ** 2)
    return l1 + l2


if __name__ == "__main__":
    B, A = 8, 4  # batch, action dim
    key = jax.random.PRNGKey(0)
    ks = jax.random.split(key, 10)

    predicted_q1 = jax.random.normal(ks[0], (B, 1), jnp.float32)
    predicted_q2 = jax.random.normal(ks[1], (B, 1), jnp.float32)
    target_next_q1 = jax.random.normal(ks[2], (B, 1), jnp.float32)
    target_next_q2 = jax.random.normal(ks[3], (B, 1), jnp.float32)
    next_mean = jax.random.normal(ks[4], (B, A), jnp.float32)
    next_std = jax.nn.softplus(jax.random.normal(ks[5], (B, A), jnp.float32)) + 0.1
    next_actions = jax.random.normal(ks[6], (B, A), jnp.float32)
    reward = jax.random.normal(ks[7], (B, 1), jnp.float32)
    done = (jax.random.uniform(ks[8], (B, 1)) > 0.8).astype(jnp.float32)
    alpha = jnp.float32(0.2)

    loss = jax.block_until_ready(
        q_loss(predicted_q1, predicted_q2, target_next_q1, target_next_q2,
               next_mean, next_std, next_actions, reward, done, alpha))

    ref = _q_loss_ref(predicted_q1, predicted_q2, target_next_q1,
                      target_next_q2, next_mean, next_std, next_actions,
                      reward, done, alpha)
    assert jnp.allclose(loss, ref, rtol=1e-5, atol=1e-5), (loss, ref)
    print("KERNEL_OK")
</pallas_src>

<mosaic_0001>
module attributes {stable_mosaic.version = 11 : i64} {
  func.func @_qloss_kernel(%arg0: memref<1x1xf32, #tpu.memory_space<smem>>, %arg1: memref<3x4x8xf32, #tpu.memory_space<vmem>>, %arg2: memref<6x8xf32, #tpu.memory_space<vmem>>, %arg3: memref<1x1xf32, #tpu.memory_space<smem>>) attributes {dimension_semantics = [], scalar_prefetch = 0 : i64, scratch_operands = 0 : i64, tpu.core_type = #tpu.core_type<tc>} {
    %c0 = arith.constant 0 : index
    %c0_0 = arith.constant 0 : index
    %0 = memref.load %arg0[%c0, %c0_0] : memref<1x1xf32, #tpu.memory_space<smem>>
    %c0_1 = arith.constant 0 : index
    %c0_2 = arith.constant 0 : index
    %c0_3 = arith.constant 0 : index
    %1 = vector.load %arg1[%c0_1, %c0_2, %c0_3] : memref<3x4x8xf32, #tpu.memory_space<vmem>>, vector<1x4x8xf32>
    %2 = vector.shape_cast %1 : vector<1x4x8xf32> to vector<4x8xf32>
    %c1 = arith.constant 1 : index
    %c0_4 = arith.constant 0 : index
    %c0_5 = arith.constant 0 : index
    %3 = vector.load %arg1[%c1, %c0_4, %c0_5] : memref<3x4x8xf32, #tpu.memory_space<vmem>>, vector<1x4x8xf32>
    %4 = vector.shape_cast %3 : vector<1x4x8xf32> to vector<4x8xf32>
    %c2 = arith.constant 2 : index
    %c0_6 = arith.constant 0 : index
    %c0_7 = arith.constant 0 : index
    %5 = vector.load %arg1[%c2, %c0_6, %c0_7] : memref<3x4x8xf32, #tpu.memory_space<vmem>>, vector<1x4x8xf32>
    %6 = vector.shape_cast %5 : vector<1x4x8xf32> to vector<4x8xf32>
    %7 = tpu.reciprocal %4 : vector<4x8xf32> -> vector<4x8xf32>
    %8 = arith.subf %6, %2 : vector<4x8xf32>
    %9 = arith.mulf %8, %7 : vector<4x8xf32>
    %cst = arith.constant -5.000000e-01 : f32
    %10 = vector.broadcast %cst : f32 to vector<4x8xf32>
    %11 = arith.mulf %10, %9 : vector<4x8xf32>
    %12 = arith.mulf %11, %9 : vector<4x8xf32>
    %13 = math.log %4 : vector<4x8xf32>
    %14 = arith.subf %12, %13 : vector<4x8xf32>
    %cst_8 = arith.constant dense<0.000000e+00> : vector<8xf32>
    %15 = vector.multi_reduction <add>, %14, %cst_8 [0] : vector<4x8xf32> to vector<8xf32>
    %16 = vector.shape_cast %15 : vector<8xf32> to vector<1x8xf32>
    %cst_9 = arith.constant 3.67575407 : f32
    %17 = vector.broadcast %cst_9 : f32 to vector<1x8xf32>
    %18 = arith.subf %16, %17 : vector<1x8xf32>
    %c0_10 = arith.constant 0 : index
    %c0_11 = arith.constant 0 : index
    %19 = vector.load %arg2[%c0_10, %c0_11] : memref<6x8xf32, #tpu.memory_space<vmem>>, vector<6x8xf32>
    %20 = vector.extract_strided_slice %19 {offsets = [0, 0], sizes = [1, 8], strides = [1, 1]} : vector<6x8xf32> to vector<1x8xf32>
    %21 = vector.extract_strided_slice %19 {offsets = [1, 0], sizes = [1, 8], strides = [1, 1]} : vector<6x8xf32> to vector<1x8xf32>
    %22 = vector.extract_strided_slice %19 {offsets = [2, 0], sizes = [1, 8], strides = [1, 1]} : vector<6x8xf32> to vector<1x8xf32>
    %23 = vector.extract_strided_slice %19 {offsets = [3, 0], sizes = [1, 8], strides = [1, 1]} : vector<6x8xf32> to vector<1x8xf32>
    %24 = vector.extract_strided_slice %19 {offsets = [4, 0], sizes = [1, 8], strides = [1, 1]} : vector<6x8xf32> to vector<1x8xf32>
    %25 = vector.extract_strided_slice %19 {offsets = [5, 0], sizes = [1, 8], strides = [1, 1]} : vector<6x8xf32> to vector<1x8xf32>
    %26 = arith.minimumf %22, %23 : vector<1x8xf32>
    %27 = vector.broadcast %0 : f32 to vector<1x8xf32>
    %28 = arith.mulf %27, %18 : vector<1x8xf32>
    %29 = arith.subf %26, %28 : vector<1x8xf32>
    %cst_12 = arith.constant 1.000000e+00 : f32
    %30 = vector.broadcast %cst_12 : f32 to vector<1x8xf32>
    %31 = arith.subf %30, %25 : vector<1x8xf32>
    %cst_13 = arith.constant 9.900000e-01 : f32
    %32 = vector.broadcast %cst_13 : f32 to vector<1x8xf32>
    %33 = arith.mulf %31, %32 : vector<1x8xf32>
    %34 = arith.mulf %33, %29 : vector<1x8xf32>
    %35 = arith.addf %24, %34 : vector<1x8xf32>
    %36 = arith.subf %35, %20 : vector<1x8xf32>
    %37 = arith.subf %35, %21 : vector<1x8xf32>
    %38 = arith.mulf %36, %36 : vector<1x8xf32>
    %39 = arith.mulf %37, %37 : vector<1x8xf32>
    %40 = arith.addf %38, %39 : vector<1x8xf32>
    %41 = vector.shape_cast %40 : vector<1x8xf32> to vector<1x1x8xf32>
    %cst_14 = arith.constant dense<0.000000e+00> : vector<1xf32>
    %42 = vector.multi_reduction <add>, %41, %cst_14 [1, 2] : vector<1x1x8xf32> to vector<1xf32>
    %43 = vector.shape_cast %42 : vector<1xf32> to vector<1x1x1xf32>
    %44 = vector.extract %43[0, 0, 0] : f32 from vector<1x1x1xf32>
    %cst_15 = arith.constant 6.250000e-02 : f32
    %45 = arith.mulf %44, %cst_15 : f32
    %c0_16 = arith.constant 0 : index
    %c0_17 = arith.constant 0 : index
    %46 = memref.load %arg3[%c0_16, %c0_17] : memref<1x1xf32, #tpu.memory_space<smem>>
    memref.store %45, %arg3[%c0_16, %c0_17] : memref<1x1xf32, #tpu.memory_space<smem>>
    return
  }
}

</mosaic_0001>

<llo_original>
// kernel: tpu_custom_call.1
$region0: #{tpu_custom_call.1}
  #allocation0 [shape = 'u32[]', space=smem, size = 0x4, offset = 0x4, fixed_abs, tag = 'smem constant byte address 0x4 - core index']
  #allocation1 [shape = 'u32[144,128]{1,0:T(1,128)}', space=vmem, size = 0x12000, scoped, tag = 'internal scratch']
  #allocation2 [shape = 'f32[1,1]{1,0:T(1,128)S(6)}', space=smem, size = 0x200, scoped, tag = 'scoped memory for tpu_custom_call.1']
  %s0 = inlined_call_operand.<no memory space> [shape: f32[1,1], index: 0, kind: input, shape index: {}]
  %s1 = inlined_call_operand.hbm [shape: f32[3,4,8], index: 1, kind: input, shape index: {}]
  %s2 = inlined_call_operand.hbm [shape: f32[6,8], index: 2, kind: input, shape index: {}]
  %s3 = inlined_call_operand.hbm [shape: f32[1,1], index: 3, kind: output, shape index: {}]
  %s4 = sld [smem:[#allocation0]]
  $region30: #{tpu_custom_call.1} parent=0
    _
  %s6 = ssub.s32 1, %s4
  %s7 = scalar_select 0, %s6, %s4
  %8 = sst [smem:[#allocation2]] %s0
  $region1: #{tpu_custom_call.1} parent=0
    #allocation3 [shape = 'u8[6144]{0}', space=vmem, size = 0x1800, scoped, tag = 'input window, operand 1, single buffered']
    #allocation4 [shape = 's32[1]{0}', space=sflag, size = 0x4, scoped, tag = 'scoped memory for tpu_custom_call.1']
    #allocation5 [shape = 's32[1]{0}', space=sflag, size = 0x4, scoped, tag = 'scoped memory for tpu_custom_call.1']
    #allocation6 [shape = 'u8[4096]{0}', space=vmem, size = 0x1000, scoped, tag = 'input window, operand 2, single buffered']
    #allocation7 [shape = 's32[1]{0}', space=sflag, size = 0x4, scoped, tag = 'scoped memory for tpu_custom_call.1']
    #allocation8 [shape = 'u8[512]{0}', space=smem, size = 0x200, scoped, tag = 'output window, operand 0, single buffered']
    %9 = vsyncpa [#allocation4], 0
    %10 = vsyncpa [#allocation7], 0
    %11 = vsyncpa [#allocation5], 0
    // Predicated region
    $region2: #{tpu_custom_call.1} parent=1 // pred_check
      _
    $region3: #{tpu_custom_call.1} parent=1 // pred_check_branch
      %13 = sbr.rel (0) target = $region5
    $region4: #{tpu_custom_call.1} parent=1 // pred_region
      _
    $region5: #{tpu_custom_call.1} parent=1 // pred_fallthru
      _
    // Predicated region
    $region6: #{tpu_custom_call.1} parent=1 // pred_check
      _
    $region7: #{tpu_custom_call.1} parent=1 // pred_check_branch
      %15 = sbr.rel (0) target = $region9
    $region8: #{tpu_custom_call.1} parent=1 // pred_region
      %s17 = ssub.s32 192, 192
      %18 = vsyncadd [#allocation4], %s17
      %s19 = sshll.u32 [#allocation3], 4
      %s20 = int_to_ptr.vmem [resolvable:$true] %s19
      %25 = dma.hbm_to_vmem [thread:$0]  %s1, 192, %s20, [#allocation4], 64, 64, 4
    $region9: #{tpu_custom_call.1} parent=1 // pred_fallthru
      _
    // Predicated region
    $region10: #{tpu_custom_call.1} parent=1 // pred_check
      _
    $region11: #{tpu_custom_call.1} parent=1 // pred_check_branch
      %27 = sbr.rel (0) target = $region13
    $region12: #{tpu_custom_call.1} parent=1 // pred_region
      %s29 = ssub.s32 128, 128
      %30 = vsyncadd [#allocation7], %s29
      %s32 = sshll.u32 [#allocation6], 4
      %s33 = int_to_ptr.vmem [resolvable:$true] %s32
      %35 = dma.hbm_to_vmem [thread:$0]  %s2, 128, %s33, [#allocation7]
    $region13: #{tpu_custom_call.1} parent=1 // pred_fallthru
      _
    // Predicated region
    $region14: #{tpu_custom_call.1} parent=1 // pred_check
      _
    $region15: #{tpu_custom_call.1} parent=1 // pred_check_branch
      %37 = sbr.rel (0) target = $region17
    $region16: #{tpu_custom_call.1} parent=1 // pred_region
      %38 = dma.done [#allocation4], 192
    $region17: #{tpu_custom_call.1} parent=1 // pred_fallthru
      _
    // Predicated region
    $region18: #{tpu_custom_call.1} parent=1 // pred_check
      _
    $region19: #{tpu_custom_call.1} parent=1 // pred_check_branch
      %40 = sbr.rel (0) target = $region21
    $region20: #{tpu_custom_call.1} parent=1 // pred_region
      %41 = dma.done [#allocation7], 128
    $region21: #{tpu_custom_call.1} parent=1 // pred_fallthru
      _
    %s42 = sld [smem:[#allocation2]]
    %v43 = vld [vmem:[#allocation3] sm:$0xf]
    %s44 = scalar_lea.vmem [#allocation3], 4
    %v45 = vld [vmem:[%s44] sm:$0xf]
    %s46 = scalar_lea.vmem [#allocation3], 8
    %v47 = vld [vmem:[%s46] sm:$0xf]
    %v48 = vrcp.pop %v45
    %v49 = vsub.f32 %v47, %v43
    %v50 = vmul.f32 %v49, %v48
    %v51 = vmul.f32 %v50, -0.5
    %v52 = vmul.f32 %v51, %v50
    %v53 = vlog2.pop %v45
    %v54 = vmul.f32 %v53, 0.6931472
    %v55 = vsub.f32 %v52, %v54
    %vm56 = vcmask 60416
    %v57 = vsel %vm56, %v55, 0.0
    %v58 = vrot.slane %v57, 4
    %v59 = vadd.f32 %v57, %v58
    %v60 = vrot.slane %v59, 2
    %v61 = vadd.f32 %v59, %v60
    %v62 = vrot.slane %v61, 1
    %v63 = vadd.f32 %v61, %v62
    %v64 = vsub.f32 %v63, 3.675754
    %v65 = vld [vmem:[#allocation6] sm:$0x3f]
    %v67 = vrot.slane %v65, 1
    %v69 = vmin.f32 %v65, %v67
    %v70 = vstv %s42
    %v71 = vmul.f32 %v70, %v64
    %v72 = vsub.f32 %v69, %v71
    %v73 = vsub.f32 1.0, %v65
    %v74 = vmul.f32 %v73, 0.99
    %v76 = vrot.slane %v72, 5
    %v78 = vmul.f32 %v74, %v76
    %v80 = vrot.slane %v78, 1
    %v82 = vadd.f32 %v65, %v80
    %v83 = vrot.slane %v65, 4
    %v85 = vsub.f32 %v82, %v83
    %v86 = vrot.slane %v65, 5
    %v88 = vsub.f32 %v82, %v86
    %v89 = vmul.f32 %v85, %v85
    %v90 = vmul.f32 %v88, %v88
    %v91 = vadd.f32 %v89, %v90
    %v93 = vrot.slane %v91, 4
    %vm95 = vcmask 57344
    %v96 = vsel %vm95, %v93, 0.0
    %97 = vadd.xlane.f32.xlu0 %v96
    %v98 = vpop.xlane.xlu0 %97
    %v99 = vrot.slane %v98, 4
    %v100 = vadd.f32 %v98, %v99
    %v101 = vrot.slane %v100, 2
    %v102 = vadd.f32 %v100, %v101
    %v103 = vrot.slane %v102, 1
    %v104 = vadd.f32 %v102, %v103
    %s105 = vtos %v104
    %s106 = smul.f32 %s105, 0.0625
    %s107 = scalar_lea.smem [#allocation8], 0
    %108 = sst [smem:[%s107]] %s106
    // Predicated region
    $region22: #{tpu_custom_call.1} parent=1 // pred_check
      _
    $region23: #{tpu_custom_call.1} parent=1 // pred_check_branch
      %110 = sbr.rel (0) target = $region25
    $region24: #{tpu_custom_call.1} parent=1 // pred_region
      %s112 = ssub.s32 16, 16
      %113 = vsyncadd [#allocation5], %s112
      %116 = dma.smem_to_hbm [#allocation8], 16, %s3, [#allocation5]
    $region25: #{tpu_custom_call.1} parent=1 // pred_fallthru
      _
    // Predicated region
    $region26: #{tpu_custom_call.1} parent=1 // pred_check
      _
    $region27: #{tpu_custom_call.1} parent=1 // pred_check_branch
      %118 = sbr.rel (0) target = $region29
    $region28: #{tpu_custom_call.1} parent=1 // pred_region
      %119 = dma.done [#allocation5], 16
    $region29: #{tpu_custom_call.1} parent=1 // pred_fallthru
      _
    %120 = sfence
    %121 = vsyncpa [#allocation4], 1
    %122 = vsyncpa [#allocation7], 1
    %123 = vsyncpa [#allocation5], 1

</llo_original>
